<compile_context>
chip_gen: v6e
topology: v6e:2x2x1
jax: 0.10.0
libtpu: 0.0.40
codegen_flags: <defaults>
</compile_context>

<pallas_src>
import functools

import jax
import jax.numpy as jnp
import numpy as np
from jax.experimental import pallas as pl
from jax.experimental.pallas import tpu as pltpu


def _ceil_div(a, b):
    return -(-a // b)


# --------------------------------------------------------------------------------------
# Chip-generation aware constants (MXU native tile, VMEM scoped limit)
# --------------------------------------------------------------------------------------
@functools.lru_cache(maxsize=None)
def _chip_config():
    kind = ""
    try:
        kind = jax.devices()[0].device_kind.lower()
    except Exception:
        pass
    # MXU native tile: 128x128 through v5, 256x256 on v6e / v7x.
    newer = any(tag in kind for tag in ("v6", "v7", "7x"))
    older = any(tag in kind for tag in ("v2", "v3", "v4", "v5"))
    mxu = 128 if (older and not newer) else 256

    vmem_cap = None
    try:
        vmem_cap = getattr(pltpu.get_tpu_info(), "vmem_capacity_bytes", None)
    except Exception:
        vmem_cap = None
    if not vmem_cap:
        vmem_cap = (64 if "7" in kind else 128) * 1024 * 1024
    # Leave headroom for Mosaic scratch; ~112 MiB on 128-MiB parts, ~48 MiB on v7x.
    vmem_limit = int(max(32 * 1024 * 1024,
                         min(vmem_cap - 16 * 1024 * 1024, 112 * 1024 * 1024)))
    return mxu, vmem_limit


# --------------------------------------------------------------------------------------
# Tiling selection
# --------------------------------------------------------------------------------------
@functools.lru_cache(maxsize=None)
def _choose_tiling(N, H, W, lane_cap, row_cap, vmem_budget):
    """Fold N images of (H, W) into lane-dense matmul slabs.

    Returns (TBr, TBc, G, GM, n_pad):
      TBc images -> lane (last) dim,  WC = TBc*W   (target: exact multiple of 128)
      TBr images -> sublane / M dim,  MR = TBr*H   (fills MXU K ~for free via kron)
      G  image groups       = outer grid axis
      GM row-tiles of A     = inner grid axis (guarantees >= 2 grid steps)
      n_pad = G*TBr*TBc >= N (images zero-padded up to n_pad).
    """
    best = None
    max_tbc = min(N, max(1, lane_cap // W)) if W <= lane_cap else 1
    for TBc in range(1, max_tbc + 1):
        WC = TBc * W
        rem = _ceil_div(N, TBc)
        max_tbr = min(rem, max(1, row_cap // H)) if H <= row_cap else 1
        for TBr in range(1, max_tbr + 1):
            MR = TBr * H
            G = _ceil_div(rem, TBr)
            if G > 1 and MR % 8 != 0:
                continue  # (8,128) rule: blocked sublane dim must be a multiple of 8
            n_pad = G * TBr * TBc
            # Per-step VMEM: double-buffered A/B/X/Y blocks (f32 worst case) + temps.
            vmem = 4 * 2 * (2 * MR * MR + 2 * WC * WC + 4 * MR * WC) + 4 * 8 * MR * WC
            if vmem > vmem_budget:
                continue
            lane_util = WC / (_ceil_div(WC, 128) * 128)
            score = 800.0 * lane_util + (200.0 if WC % 128 == 0 else 0.0)  # unmasked vst
            if G >= 2:
                score += 300.0                                # megacore / DMA overlap
            if G >= 4:
                score += 100.0
            score -= 600.0 * (n_pad / N - 1.0)                # dummy-image work
            score += 150.0 * min(MR, row_cap) / row_cap       # fill MXU K (free via kron)
            score += 150.0 * min(WC, lane_cap) / lane_cap     # fill MXU N
            if best is None or score > best[0]:
                best = (score, TBr, TBc, G, n_pad)

    if best is None:
        # TODO(synk): dense DFT operators exceed the VMEM budget for this H/W; a K-tiled
        # grid axis with a VMEM accumulator would be needed.  Fall back to 1 image/step.
        TBr, TBc, n_pad = 1, 1, N
        G = N if (N == 1 or H % 8 == 0) else 1
        if G == 1 and N > 1:
            TBr = N
    else:
        _, TBr, TBc, G, n_pad = best

    # Guarantee >= 2 grid steps (v7x has 2 TensorCores; also gives DMA/compute overlap)
    # by row-splitting the left operator when the group axis collapses to length 1.
    MR = TBr * H
    GM = 1
    if G == 1:
        for g in range(2, 9):
            if MR % g == 0 and (MR // g) % 8 == 0:
                GM = g
                break
    return TBr, TBc, G, GM, n_pad


# --------------------------------------------------------------------------------------
# Host-side (cached) operator construction + device operator cache
# --------------------------------------------------------------------------------------
@functools.lru_cache(maxsize=None)
def _base_idft_mats(n, centered):
    """Left matrix (op(x) = A @ x, axis 0) and right matrix (op(x) = x @ B, axis 1)."""
    eye = np.eye(n, dtype=np.complex64)
    if centered:
        left = np.fft.fftshift(
            np.fft.ifft(np.fft.ifftshift(eye, axes=0), axis=0, norm="ortho"), axes=0)
        right = np.fft.fftshift(
            np.fft.ifft(np.fft.ifftshift(eye, axes=1), axis=1, norm="ortho"), axes=1)
    else:
        left = np.fft.ifft(eye, axis=0, norm="ortho")
        right = np.fft.ifft(eye, axis=1, norm="ortho")
    return left, right


@functools.lru_cache(maxsize=None)
def _packed_idft_mats(H, W, TBr, TBc, centered):
    """Stacked (real, imag) block-diagonal operators for the tiled slab layout."""
    a = _base_idft_mats(H, centered)[0]          # (H, H)  left operator
    b = _base_idft_mats(W, centered)[1]          # (W, W)  right operator
    a_blk = np.kron(np.eye(TBr), a)              # (TBr*H, TBr*H)
    b_blk = np.kron(np.eye(TBc), b)              # (TBc*W, TBc*W)
    a_pack = np.stack([a_blk.real, a_blk.imag]).astype(np.float32)
    b_pack = np.stack([b_blk.real, b_blk.imag]).astype(np.float32)
    return a_pack, b_pack


_DEVICE_OP_CACHE = {}


def _device_ops(H, W, TBr, TBc, centered, dtype):
    """Device-resident operator cache: no per-call host->device upload of the DFT mats."""
    key = (H, W, TBr, TBc, bool(centered), jnp.dtype(dtype).name)
    if key not in _DEVICE_OP_CACHE:
        a_np, b_np = _packed_idft_mats(H, W, TBr, TBc, bool(centered))
        _DEVICE_OP_CACHE[key] = (jnp.asarray(a_np, dtype=dtype),
                                 jnp.asarray(b_np, dtype=dtype))
    return _DEVICE_OP_CACHE[key]


# --------------------------------------------------------------------------------------
# Kernel: one (MRT x WC) output row-tile per grid step
# --------------------------------------------------------------------------------------
def _ifft2c_kernel(amat_ref, bmat_ref, x_ref, y_ref, *, karatsuba):
    dot = lambda a, b: jnp.dot(a, b, preferred_element_type=jnp.float32)
    cd = x_ref.dtype
    ar, ai = amat_ref[0], amat_ref[1]   # (MRT, MR)  left operator row-tile
    br, bi = bmat_ref[0], bmat_ref[1]   # (WC, WC)   right operator (resident tile)
    xr, xi = x_ref[0], x_ref[1]         # (MR, WC)   image slab (real / imag planes)

    if karatsuba:
        # f32 path: 3-multiply complex matmul per stage (6 MXU passes total).
        # (ar+ai)/(br+bi) are one VPU add on resident tiles (replaces the precomputed
        # "sum" operator plane -> less operator VMEM & DMA).  p1..p3 die before stage 2.
        p1 = dot(ar, xr)
        p2 = dot(ai, xi)
        p3 = dot(ar + ai, xr + xi)
        tr = p1 - p2
        ti = p3 - p1 - p2
        q1 = dot(tr, br)
        q2 = dot(ti, bi)
        q3 = dot(tr + ti, br + bi)
        y_ref[0] = q1 - q2
        y_ref[1] = q3 - q1 - q2
    else:
        # Reduced-precision path (bf16 inputs, f32 MXU accumulation): plain 4-multiply
        # form — avoids Karatsuba's (a+b)(c+d)-ac-bd cancellation at low precision.
        tr = (dot(ar, xr) - dot(ai, xi)).astype(cd)
        ti = (dot(ar, xi) + dot(ai, xr)).astype(cd)
        y_ref[0] = dot(tr, br) - dot(ti, bi)
        y_ref[1] = dot(tr, bi) + dot(ti, br)


# --------------------------------------------------------------------------------------
# Wrapper
# --------------------------------------------------------------------------------------
def ifft2c(x, *, centered=True, compute_dtype=jnp.float32):
    """Pallas TPU implementation of IFFT2C.forward for dim=(-2, -1), norm='ortho'."""
    assert x.ndim == 4, "expected (B, C, H, W)"
    B, C, H, W = x.shape
    N = B * C
    mxu, vmem_limit = _chip_config()

    xc = x.astype(jnp.complex64)
    xr = jnp.real(xc).astype(jnp.float32).reshape(N, H, W)
    xi = jnp.imag(xc).astype(jnp.float32).reshape(N, H, W)

    TBr, TBc, G, GM, n_pad = _choose_tiling(
        N, H, W, lane_cap=mxu, row_cap=mxu, vmem_budget=int(0.7 * vmem_limit))
    MR, WC = TBr * H, TBc * W
    MRT = MR // GM

    # Re-pack (N, H, W) -> lane-dense slab (G*MR, WC); pure layout plumbing in XLA.
    # TODO(synk): the repack/unpack transposes are separate XLA kernels (one extra HBM
    # round trip each side); if xprof shows them dominating for small H/W, fold the TBc
    # gather into the input BlockSpec index_map and keep only the output lane-dense.
    def to_slab(p):
        if n_pad != N:
            p = jnp.concatenate([p, jnp.zeros((n_pad - N, H, W), p.dtype)], axis=0)
        p = p.reshape(G, TBr, TBc, H, W).transpose(0, 1, 3, 2, 4)
        return p.reshape(G * MR, WC)

    x2 = jnp.stack([to_slab(xr), to_slab(xi)]).astype(compute_dtype)   # (2, G*MR, WC)
    amats, bmats = _device_ops(H, W, TBr, TBc, centered, compute_dtype)

    karatsuba = jnp.dtype(compute_dtype).itemsize >= 4   # 3-mult only at full precision
    kernel = functools.partial(_ifft2c_kernel, karatsuba=karatsuba)

    # grid = (image groups, row-tiles of the left operator): both axes fully parallel.
    # B and the X slab keep a constant block index along the inner axis so the pipeline
    # holds them resident (no re-DMA across the GM steps).
    # TODO(synk): pipeline_mode=pl.Buffered(1) on the operator specs would drop their
    # (useless) second pipeline buffer; left at the default here for compatibility.
    grid = (G, GM)
    mat_a_spec = pl.BlockSpec((2, MRT, MR), lambda i, m: (0, m, 0))
    mat_b_spec = pl.BlockSpec((2, WC, WC), lambda i, m: (0, 0, 0))
    img_spec = pl.BlockSpec((2, MR, WC), lambda i, m: (0, i, 0))
    out_spec = pl.BlockSpec((2, MRT, WC), lambda i, m: (0, i * GM + m, 0))

    y2 = pl.pallas_call(
        kernel,
        grid=grid,
        in_specs=[mat_a_spec, mat_b_spec, img_spec],
        out_specs=out_spec,
        out_shape=jax.ShapeDtypeStruct((2, G * MR, WC), jnp.float32),
        compiler_params=pltpu.CompilerParams(
            dimension_semantics=("parallel", "parallel"),
            vmem_limit_bytes=vmem_limit,
        ),
    )(amats, bmats, x2)

    def from_slab(p):
        p = p.reshape(G, TBr, H, TBc, W).transpose(0, 1, 3, 2, 4).reshape(n_pad, H, W)
        return p[:N].reshape(B, C, H, W)

    return jax.lax.complex(from_slab(y2[0]), from_slab(y2[1])).astype(jnp.complex64)


if __name__ == "__main__":
    key = jax.random.PRNGKey(0)
    kr, ki = jax.random.split(key)
    B, C, H, W = 2, 4, 16, 16
    x = (jax.random.normal(kr, (B, C, H, W), dtype=jnp.float32)
         + 1j * jax.random.normal(ki, (B, C, H, W), dtype=jnp.float32)).astype(jnp.complex64)

    fwd = jax.jit(ifft2c, static_argnames=("centered", "compute_dtype"))

    # Default (f32 Karatsuba) path: must meet the 1e-4 budget of the reference module.
    y = jax.block_until_ready(fwd(x, centered=True))
    ref = jnp.fft.fftshift(
        jnp.fft.ifft2(jnp.fft.ifftshift(x, axes=(-2, -1)), axes=(-2, -1), norm="ortho"),
        axes=(-2, -1),
    )
    np.testing.assert_allclose(np.asarray(y), np.asarray(ref), atol=1e-4, rtol=1e-4)

    # Reduced-precision MXU path (bf16 inputs, f32 accumulation, 4-multiply complex
    # form): ~2-4x cheaper on the MXU at a looser accuracy level than the default.
    y_bf16 = jax.block_until_ready(fwd(x, centered=True, compute_dtype=jnp.bfloat16))
    np.testing.assert_allclose(np.asarray(y_bf16), np.asarray(ref), atol=5e-2, rtol=5e-2)

    print("KERNEL_OK")
</pallas_src>

<mosaic_0001>
module attributes {stable_mosaic.version = 11 : i64} {
  func.func @_ifft2c_kernel(%arg0: i32, %arg1: i32, %arg2: memref<2x8x16xf32, #tpu.memory_space<vmem>>, %arg3: memref<2x128x128xf32, #tpu.memory_space<vmem>>, %arg4: memref<2x16x128xf32, #tpu.memory_space<vmem>>, %arg5: memref<2x8x128xf32, #tpu.memory_space<vmem>>) attributes {dimension_semantics = [#tpu.dimension_semantics<parallel>, #tpu.dimension_semantics<parallel>], iteration_bounds = array<i64: 1, 2>, scalar_prefetch = 0 : i64, scratch_operands = 0 : i64, tpu.core_type = #tpu.core_type<tc>, window_params = [{transform_indices = @transform_0, window_bounds = array<i64: 2, 8, 16>}, {pipeline_mode = #tpu.pipeline_mode<synchronous>, transform_indices = @transform_1, window_bounds = array<i64: 2, 128, 128>}, {transform_indices = @transform_2, window_bounds = array<i64: 2, 16, 128>}, {transform_indices = @transform_3, window_bounds = array<i64: 2, 8, 128>}]} {
    %c0 = arith.constant 0 : index
    %c0_0 = arith.constant 0 : index
    %c0_1 = arith.constant 0 : index
    %0 = vector.load %arg2[%c0, %c0_0, %c0_1] : memref<2x8x16xf32, #tpu.memory_space<vmem>>, vector<1x8x16xf32>
    %1 = vector.shape_cast %0 : vector<1x8x16xf32> to vector<8x16xf32>
    %c1 = arith.constant 1 : index
    %c0_2 = arith.constant 0 : index
    %c0_3 = arith.constant 0 : index
    %2 = vector.load %arg2[%c1, %c0_2, %c0_3] : memref<2x8x16xf32, #tpu.memory_space<vmem>>, vector<1x8x16xf32>
    %3 = vector.shape_cast %2 : vector<1x8x16xf32> to vector<8x16xf32>
    %c0_4 = arith.constant 0 : index
    %c0_5 = arith.constant 0 : index
    %c0_6 = arith.constant 0 : index
    %4 = vector.load %arg3[%c0_4, %c0_5, %c0_6] : memref<2x128x128xf32, #tpu.memory_space<vmem>>, vector<1x128x128xf32>
    %5 = vector.shape_cast %4 : vector<1x128x128xf32> to vector<128x128xf32>
    %c1_7 = arith.constant 1 : index
    %c0_8 = arith.constant 0 : index
    %c0_9 = arith.constant 0 : index
    %6 = vector.load %arg3[%c1_7, %c0_8, %c0_9] : memref<2x128x128xf32, #tpu.memory_space<vmem>>, vector<1x128x128xf32>
    %7 = vector.shape_cast %6 : vector<1x128x128xf32> to vector<128x128xf32>
    %c0_10 = arith.constant 0 : index
    %c0_11 = arith.constant 0 : index
    %c0_12 = arith.constant 0 : index
    %8 = vector.load %arg4[%c0_10, %c0_11, %c0_12] : memref<2x16x128xf32, #tpu.memory_space<vmem>>, vector<1x16x128xf32>
    %9 = vector.shape_cast %8 : vector<1x16x128xf32> to vector<16x128xf32>
    %c1_13 = arith.constant 1 : index
    %c0_14 = arith.constant 0 : index
    %c0_15 = arith.constant 0 : index
    %10 = vector.load %arg4[%c1_13, %c0_14, %c0_15] : memref<2x16x128xf32, #tpu.memory_space<vmem>>, vector<1x16x128xf32>
    %11 = vector.shape_cast %10 : vector<1x16x128xf32> to vector<16x128xf32>
    %cst = arith.constant dense<0.000000e+00> : vector<8x128xf32>
    %12 = tpu.matmul %1, %9, %cst {dimension_numbers = #tpu.dot_dimension_numbers<[1], [0], [0], [1], [0, 0, 1, 1], [], []>} : vector<8x16xf32>, vector<16x128xf32>, vector<8x128xf32> -> vector<8x128xf32>
    %cst_16 = arith.constant dense<0.000000e+00> : vector<8x128xf32>
    %13 = tpu.matmul %3, %11, %cst_16 {dimension_numbers = #tpu.dot_dimension_numbers<[1], [0], [0], [1], [0, 0, 1, 1], [], []>} : vector<8x16xf32>, vector<16x128xf32>, vector<8x128xf32> -> vector<8x128xf32>
    %14 = arith.addf %1, %3 : vector<8x16xf32>
    %15 = arith.addf %9, %11 : vector<16x128xf32>
    %cst_17 = arith.constant dense<0.000000e+00> : vector<8x128xf32>
    %16 = tpu.matmul %14, %15, %cst_17 {dimension_numbers = #tpu.dot_dimension_numbers<[1], [0], [0], [1], [0, 0, 1, 1], [], []>} : vector<8x16xf32>, vector<16x128xf32>, vector<8x128xf32> -> vector<8x128xf32>
    %17 = arith.subf %12, %13 : vector<8x128xf32>
    %18 = arith.subf %16, %12 : vector<8x128xf32>
    %19 = arith.subf %18, %13 : vector<8x128xf32>
    %cst_18 = arith.constant dense<0.000000e+00> : vector<8x128xf32>
    %20 = tpu.matmul %17, %5, %cst_18 {dimension_numbers = #tpu.dot_dimension_numbers<[1], [0], [0], [1], [0, 0, 1, 1], [], []>} : vector<8x128xf32>, vector<128x128xf32>, vector<8x128xf32> -> vector<8x128xf32>
    %cst_19 = arith.constant dense<0.000000e+00> : vector<8x128xf32>
    %21 = tpu.matmul %19, %7, %cst_19 {dimension_numbers = #tpu.dot_dimension_numbers<[1], [0], [0], [1], [0, 0, 1, 1], [], []>} : vector<8x128xf32>, vector<128x128xf32>, vector<8x128xf32> -> vector<8x128xf32>
    %22 = arith.addf %17, %19 : vector<8x128xf32>
    %23 = arith.addf %5, %7 : vector<128x128xf32>
    %cst_20 = arith.constant dense<0.000000e+00> : vector<8x128xf32>
    %24 = tpu.matmul %22, %23, %cst_20 {dimension_numbers = #tpu.dot_dimension_numbers<[1], [0], [0], [1], [0, 0, 1, 1], [], []>} : vector<8x128xf32>, vector<128x128xf32>, vector<8x128xf32> -> vector<8x128xf32>
    %25 = arith.subf %20, %21 : vector<8x128xf32>
    %c0_21 = arith.constant 0 : index
    %c0_22 = arith.constant 0 : index
    %c0_23 = arith.constant 0 : index
    %26 = vector.load %arg5[%c0_21, %c0_22, %c0_23] : memref<2x8x128xf32, #tpu.memory_space<vmem>>, vector<1x8x128xf32>
    %27 = vector.shape_cast %26 : vector<1x8x128xf32> to vector<8x128xf32>
    %28 = vector.shape_cast %25 : vector<8x128xf32> to vector<1x8x128xf32>
    tpu.vector_store %arg5[%c0_21, %c0_22, %c0_23], %28 {strides = array<i32>} : memref<2x8x128xf32, #tpu.memory_space<vmem>>, vector<1x8x128xf32>,
    %29 = arith.subf %24, %20 : vector<8x128xf32>
    %30 = arith.subf %29, %21 : vector<8x128xf32>
    %c1_24 = arith.constant 1 : index
    %c0_25 = arith.constant 0 : index
    %c0_26 = arith.constant 0 : index
    %31 = vector.load %arg5[%c1_24, %c0_25, %c0_26] : memref<2x8x128xf32, #tpu.memory_space<vmem>>, vector<1x8x128xf32>
    %32 = vector.shape_cast %31 : vector<1x8x128xf32> to vector<8x128xf32>
    %33 = vector.shape_cast %30 : vector<8x128xf32> to vector<1x8x128xf32>
    tpu.vector_store %arg5[%c1_24, %c0_25, %c0_26], %33 {strides = array<i32>} : memref<2x8x128xf32, #tpu.memory_space<vmem>>, vector<1x8x128xf32>,
    return
  }
  func.func @transform_0(%arg0: i32, %arg1: i32) -> (i32, i32, i32) {
    %c0_i32 = arith.constant 0 : i32
    %c0_i32_0 = arith.constant 0 : i32
    %c0_i32_1 = arith.constant 0 : i32
    return %c0_i32, %arg1, %c0_i32_0 : i32, i32, i32
  }
  func.func @transform_1(%arg0: i32, %arg1: i32) -> (i32, i32, i32) {
    %c0_i32 = arith.constant 0 : i32
    %c0_i32_0 = arith.constant 0 : i32
    %c0_i32_1 = arith.constant 0 : i32
    %c0_i32_2 = arith.constant 0 : i32
    return %c0_i32, %c0_i32_0, %c0_i32_1 : i32, i32, i32
  }
  func.func @transform_2(%arg0: i32, %arg1: i32) -> (i32, i32, i32) {
    %c0_i32 = arith.constant 0 : i32
    %c0_i32_0 = arith.constant 0 : i32
    %c0_i32_1 = arith.constant 0 : i32
    return %c0_i32, %arg0, %c0_i32_0 : i32, i32, i32
  }
  func.func @transform_3(%arg0: i32, %arg1: i32) -> (i32, i32, i32) {
    %c2_i32 = arith.constant 2 : i32
    %0 = arith.muli %arg0, %c2_i32 : i32
    %1 = arith.addi %0, %arg1 : i32
    %c0_i32 = arith.constant 0 : i32
    %c0_i32_0 = arith.constant 0 : i32
    %c0_i32_1 = arith.constant 0 : i32
    return %c0_i32, %1, %c0_i32_0 : i32, i32, i32
  }
}

</mosaic_0001>

<llo_original>
// kernel: custom-call
$region0: #{custom-call}
  %s0 = inlined_call_operand.hbm [shape: c64[2,4,16,16], index: 0, kind: input, shape index: {}]
  %s1 = inlined_call_operand.vmem [shape: f32[2,4,16,16], index: 1, kind: output, shape index: {}]
  $region1: #{custom-call} parent=0
    #allocation0 [shape = 's32[1]{0}', space=sflag, size = 0x4, scoped, tag = 'scoped memory for custom-call']
    %2 = vsyncpa [#allocation0], 0
    %s3 = sshll.u32 %s1, 4
    %s4 = int_to_ptr.vmem [resolvable:$true] %s3
    %6 = dma.hbm_to_vmem [thread:$0]  %s0, 2048, %s4, [#allocation0]
    %7 = dma.done [#allocation0], 2048
    %8 = vsyncpa [#allocation0], 1

// kernel: custom-call.1
$region0: #{custom-call.1}
  %s0 = inlined_call_operand.hbm [shape: c64[2,4,16,16], index: 0, kind: input, shape index: {}]
  %s1 = inlined_call_operand.vmem [shape: f32[2,4,16,16], index: 1, kind: output, shape index: {}]
  %s2 = scalar_lea.hbm %s0, 2048
  $region1: #{custom-call.1} parent=0
    #allocation0 [shape = 's32[1]{0}', space=sflag, size = 0x4, scoped, tag = 'scoped memory for custom-call.1']
    %3 = vsyncpa [#allocation0], 0
    %s4 = sshll.u32 %s1, 4
    %s5 = int_to_ptr.vmem [resolvable:$true] %s4
    %7 = dma.hbm_to_vmem [thread:$0]  %s2, 2048, %s5, [#allocation0]
    %8 = dma.done [#allocation0], 2048
    %9 = vsyncpa [#allocation0], 1

// kernel: squeeze.3
$region0: #{squeeze.3}
  %s0 = inlined_call_operand.vmem [shape: f32[1,16,128], index: 0, kind: input, shape index: {}]
  %s1 = inlined_call_operand.vmem [shape: f32[1,1,16,8,16], index: 1, kind: output, shape index: {}]
  %v2 = vld [vmem:[%s0] sm:$0xff]
  %vm3 = vcmask 130048
  %4 = vst.msk [vmem:[%s1] ss:$8 sm:$0xf] %vm3, %v2
  %5 = vst.msk [vmem:[%s1] ss:$8 sm:$0xf0] %vm3, %v2
  %s6 = scalar_lea.vmem %s0, 8
  %v7 = vld [vmem:[%s6] sm:$0xff]
  %vm8 = vcmask 130048
  %s9 = scalar_lea.vmem %s1, 64
  %10 = vst.msk [vmem:[%s9] ss:$8 sm:$0xf] %vm8, %v7
  %s11 = scalar_lea.vmem %s1, 64
  %12 = vst.msk [vmem:[%s11] ss:$8 sm:$0xf0] %vm8, %v7
  %v13 = vld [vmem:[%s0] sm:$0xff]
  %14 = vrot.lane.b32.xlu0 %v13, 112
  %v15 = vpop.permute.xlu0 %14
  %vm16 = vcmask 130048
  %s17 = scalar_lea.vmem %s1, 1
  %18 = vst.msk [vmem:[%s17] ss:$8 sm:$0xf] %vm16, %v15
  %s19 = scalar_lea.vmem %s1, 1
  %20 = vst.msk [vmem:[%s19] ss:$8 sm:$0xf0] %vm16, %v15
  %s21 = scalar_lea.vmem %s0, 8
  %v22 = vld [vmem:[%s21] sm:$0xff]
  %23 = vrot.lane.b32.xlu0 %v22, 112
  %v24 = vpop.permute.xlu0 %23
  %vm25 = vcmask 130048
  %s26 = scalar_lea.vmem %s1, 65
  %27 = vst.msk [vmem:[%s26] ss:$8 sm:$0xf] %vm25, %v24
  %s28 = scalar_lea.vmem %s1, 65
  %29 = vst.msk [vmem:[%s28] ss:$8 sm:$0xf0] %vm25, %v24
  %v30 = vld [vmem:[%s0] sm:$0xff]
  %31 = vrot.lane.b32.xlu0 %v30, 96
  %v32 = vpop.permute.xlu0 %31
  %vm33 = vcmask 130048
  %s34 = scalar_lea.vmem %s1, 2
  %35 = vst.msk [vmem:[%s34] ss:$8 sm:$0xf] %vm33, %v32
  %s36 = scalar_lea.vmem %s1, 2
  %37 = vst.msk [vmem:[%s36] ss:$8 sm:$0xf0] %vm33, %v32
  %s38 = scalar_lea.vmem %s0, 8
  %v39 = vld [vmem:[%s38] sm:$0xff]
  %40 = vrot.lane.b32.xlu0 %v39, 96
  %v41 = vpop.permute.xlu0 %40
  %vm42 = vcmask 130048
  %s43 = scalar_lea.vmem %s1, 66
  %44 = vst.msk [vmem:[%s43] ss:$8 sm:$0xf] %vm42, %v41
  %s45 = scalar_lea.vmem %s1, 66
  %46 = vst.msk [vmem:[%s45] ss:$8 sm:$0xf0] %vm42, %v41
  %v47 = vld [vmem:[%s0] sm:$0xff]
  %48 = vrot.lane.b32.xlu0 %v47, 80
  %v49 = vpop.permute.xlu0 %48
  %vm50 = vcmask 130048
  %s51 = scalar_lea.vmem %s1, 3
  %52 = vst.msk [vmem:[%s51] ss:$8 sm:$0xf] %vm50, %v49
  %s53 = scalar_lea.vmem %s1, 3
  %54 = vst.msk [vmem:[%s53] ss:$8 sm:$0xf0] %vm50, %v49
  %s55 = scalar_lea.vmem %s0, 8
  %v56 = vld [vmem:[%s55] sm:$0xff]
  %57 = vrot.lane.b32.xlu0 %v56, 80
  %v58 = vpop.permute.xlu0 %57
  %vm59 = vcmask 130048
  %s60 = scalar_lea.vmem %s1, 67
  %61 = vst.msk [vmem:[%s60] ss:$8 sm:$0xf] %vm59, %v58
  %s62 = scalar_lea.vmem %s1, 67
  %63 = vst.msk [vmem:[%s62] ss:$8 sm:$0xf0] %vm59, %v58
  %v64 = vld [vmem:[%s0] sm:$0xff]
  %65 = vrot.lane.b32.xlu0 %v64, 64
  %v66 = vpop.permute.xlu0 %65
  %vm67 = vcmask 130048
  %s68 = scalar_lea.vmem %s1, 4
  %69 = vst.msk [vmem:[%s68] ss:$8 sm:$0xf] %vm67, %v66
  %s70 = scalar_lea.vmem %s1, 4
  %71 = vst.msk [vmem:[%s70] ss:$8 sm:$0xf0] %vm67, %v66
  %s72 = scalar_lea.vmem %s0, 8
  %v73 = vld [vmem:[%s72] sm:$0xff]
  %74 = vrot.lane.b32.xlu0 %v73, 64
  %v75 = vpop.permute.xlu0 %74
  %vm76 = vcmask 130048
  %s77 = scalar_lea.vmem %s1, 68
  %78 = vst.msk [vmem:[%s77] ss:$8 sm:$0xf] %vm76, %v75
  %s79 = scalar_lea.vmem %s1, 68
  %80 = vst.msk [vmem:[%s79] ss:$8 sm:$0xf0] %vm76, %v75
  %v81 = vld [vmem:[%s0] sm:$0xff]
  %82 = vrot.lane.b32.xlu0 %v81, 48
  %v83 = vpop.permute.xlu0 %82
  %vm84 = vcmask 130048
  %s85 = scalar_lea.vmem %s1, 5
  %86 = vst.msk [vmem:[%s85] ss:$8 sm:$0xf] %vm84, %v83
  %s87 = scalar_lea.vmem %s1, 5
  %88 = vst.msk [vmem:[%s87] ss:$8 sm:$0xf0] %vm84, %v83
  %s89 = scalar_lea.vmem %s0, 8
  %v90 = vld [vmem:[%s89] sm:$0xff]
  %91 = vrot.lane.b32.xlu0 %v90, 48
  %v92 = vpop.permute.xlu0 %91
  %vm93 = vcmask 130048
  %s94 = scalar_lea.vmem %s1, 69
  %95 = vst.msk [vmem:[%s94] ss:$8 sm:$0xf] %vm93, %v92
  %s96 = scalar_lea.vmem %s1, 69
  %97 = vst.msk [vmem:[%s96] ss:$8 sm:$0xf0] %vm93, %v92
  %v98 = vld [vmem:[%s0] sm:$0xff]
  %99 = vrot.lane.b32.xlu0 %v98, 32
  %v100 = vpop.permute.xlu0 %99
  %vm101 = vcmask 130048
  %s102 = scalar_lea.vmem %s1, 6
  %103 = vst.msk [vmem:[%s102] ss:$8 sm:$0xf] %vm101, %v100
  %s104 = scalar_lea.vmem %s1, 6
  %105 = vst.msk [vmem:[%s104] ss:$8 sm:$0xf0] %vm101, %v100
  %s106 = scalar_lea.vmem %s0, 8
  %v107 = vld [vmem:[%s106] sm:$0xff]
  %108 = vrot.lane.b32.xlu0 %v107, 32
  %v109 = vpop.permute.xlu0 %108
  %vm110 = vcmask 130048
  %s111 = scalar_lea.vmem %s1, 70
  %112 = vst.msk [vmem:[%s111] ss:$8 sm:$0xf] %vm110, %v109
  %s113 = scalar_lea.vmem %s1, 70
  %114 = vst.msk [vmem:[%s113] ss:$8 sm:$0xf0] %vm110, %v109
  %v115 = vld [vmem:[%s0] sm:$0xff]
  %116 = vrot.lane.b32.xlu0 %v115, 16
  %v117 = vpop.permute.xlu0 %116
  %vm118 = vcmask 130048
  %s119 = scalar_lea.vmem %s1, 7
  %120 = vst.msk [vmem:[%s119] ss:$8 sm:$0xf] %vm118, %v117
  %s121 = scalar_lea.vmem %s1, 7
  %122 = vst.msk [vmem:[%s121] ss:$8 sm:$0xf0] %vm118, %v117
  %s123 = scalar_lea.vmem %s0, 8
  %v124 = vld [vmem:[%s123] sm:$0xff]
  %125 = vrot.lane.b32.xlu0 %v124, 16
  %v126 = vpop.permute.xlu0 %125
  %vm127 = vcmask 130048
  %s128 = scalar_lea.vmem %s1, 71
  %129 = vst.msk [vmem:[%s128] ss:$8 sm:$0xf] %vm127, %v126
  %s130 = scalar_lea.vmem %s1, 71
  %131 = vst.msk [vmem:[%s130] ss:$8 sm:$0xf0] %vm127, %v126

// kernel: custom-call.2
$region0: #{custom-call.2}
  %s0 = inlined_call_operand.vmem [shape: f32[2,4,16,16], index: 0, kind: input, shape index: {}]
  %s1 = inlined_call_operand.vmem [shape: f32[2,4,16,16], index: 1, kind: input, shape index: {}]
  %s2 = inlined_call_operand.hbm [shape: c64[2,4,16,16], index: 2, kind: output, shape index: {}]
  %s3 = scalar_lea.hbm %s2, 2048
  $region1: #{custom-call.2} parent=0
    #allocation0 [shape = 's32[1]{0}', space=sflag, size = 0x4, scoped, tag = 'scoped memory for custom-call.2']
    %4 = vsyncpa [#allocation0], 0
    %s5 = sshll.u32 %s0, 4
    %s6 = int_to_ptr.vmem [resolvable:$true] %s5
    %8 = dma.vmem_to_hbm [thread:$0]  %s6, 2048, %s2, [#allocation0]
    %9 = dma.done [#allocation0], 2048
    %10 = vsyncpa [#allocation0], 1
  $region2: #{custom-call.2} parent=0
    #allocation1 [shape = 's32[1]{0}', space=sflag, size = 0x4, scoped, tag = 'scoped memory for custom-call.2']
    %11 = vsyncpa [#allocation1], 0
    %s12 = sshll.u32 %s1, 4
    %s13 = int_to_ptr.vmem [resolvable:$true] %s12
    %15 = dma.vmem_to_hbm [thread:$0]  %s13, 2048, %s3, [#allocation1]
    %16 = dma.done [#allocation1], 2048
    %17 = vsyncpa [#allocation1], 1

// kernel: ifft2c.1
$region0: #{ifft2c.1}
  #allocation0 [shape = 'u32[]', space=smem, size = 0x4, offset = 0x4, fixed_abs, tag = 'smem constant byte address 0x4 - core index']
  #allocation1 [shape = 'u32[144,128]{1,0:T(1,128)}', space=vmem, size = 0x12000, scoped, tag = 'internal scratch']
  %s0 = inlined_call_operand.vmem [shape: f32[2,16,16], index: 0, kind: input, shape index: {}]
  %s1 = inlined_call_operand.vmem [shape: f32[2,128,128], index: 1, kind: input, shape index: {}]
  %s2 = inlined_call_operand.vmem [shape: f32[2,16,128], index: 2, kind: input, shape index: {}]
  %s3 = inlined_call_operand.vmem [shape: f32[2,16,128], index: 3, kind: output, shape index: {}]
  %s4 = sld [smem:[#allocation0]]
  $region117: #{ifft2c.1} parent=0
    _
  %s6 = ssub.s32 1, %s4
  %s7 = scalar_select 0, %s6, %s4
  $region1: #{ifft2c.1} parent=0
    #allocation2 [shape = 'u8[16384]{0}', space=vmem, size = 0x4000, scoped, tag = 'input window, operand 0']
    #allocation3 [shape = 'u8[16384]{0}', space=vmem, size = 0x4000, scoped, tag = 'output window, operand 0']
    loop: start=0, step=1, limit=4
    $region2: #{ifft2c.1} parent=1 // loop_pre_header
      _
    $region3: #{ifft2c.1} parent=1 // loop_header
      %s9 = sphi 0, %s13
      %p10 = scmp.ge.s32.totalorder %s9, 4
      %s16 = sphi 0, %s28
      %s17 = sphi 0, %s24
      %s18 = sphi 0, %s16
      %s19 = sphi 0, %s17
      %s20 = sphi 0, %s18
      %s21 = sphi 0, %s19
      %s31 = sphi 0, %s33
      %s34 = sphi 0, %s31
      %s35 = sphi 0, %s34
      %s51 = sphi 0, %s35
      %s55 = sphi 0, %s55
      %s57 = sphi 0, %s55
      %s58 = sphi 0, %s57
      %s72 = sphi 0, %s58
      %s78 = sphi 0, %s80
      %s81 = sphi 0, %s78
      %s82 = sphi 0, %s81
      %s98 = sphi 0, %s82
      %s108 = sphi 0, %s110
      %s111 = sphi 0, %s108
      %s112 = sphi 0, %s111
      %s128 = sphi 0, %s112
    $region4: #{ifft2c.1} parent=1 // loop_header_branch
      %12 = sbr.rel (%p10) target = $region8
    $region5: #{ifft2c.1} parent=1 // loop_body
      %s14 = ssub.s32 %s9, 1
      %s15 = ssub.s32 %s9, 2
      %s22 = sadd.s32 1, %s17
      %p23 = scmp.ge.s32.totalorder %s22, 2
      %s24 = scalar_select %p23, 0, %s22
      %s25 = sadd.s32 1, %s16
      %s26 = scalar_select %p23, %s25, %s16
      %p27 = scmp.ge.s32.totalorder %s26, 1
      %s28 = scalar_select %p27, 0, %s26
      %s29 = ssub.s32 %s17, %s24
      %p30 = scmp.eq.s32.totalorder %s29, 0
      %s32 = sadd.s32 %s31, 1
      %s33 = scalar_select %p30, %s31, %s32
      %p36 = pneg %p30
      %p37 = scmp.eq.s32.totalorder %s9, 1
      %p38 = por %p36, %p37
      %p39 = scmp.ne.s32.totalorder %s31, %s34
      %p40 = scmp.eq.s32.totalorder %s9, 0
      %p41 = por %p39, %p40
      %p42 = scmp.ne.s32.totalorder %s31, %s34
      %p43 = scmp.eq.s32.totalorder %s14, 1
      %p44 = por %p42, %p43
      %p45 = scmp.ne.s32.totalorder %s34, %s35
      %p46 = scmp.eq.s32.totalorder %s14, 0
      %p47 = por %p45, %p46
      %p48 = scmp.ne.s32.totalorder %s34, %s35
      %p49 = scmp.eq.s32.totalorder %s15, 1
      %p50 = por %p48, %p49
      %p52 = scmp.ne.s32.totalorder %s35, %s51
      %p53 = scmp.eq.s32.totalorder %s15, 0
      %p54 = por %p52, %p53
      %s56 = sadd.s32 %s55, 1
      %p59 = scmp.eq.s32.totalorder %s9, 1
      %p60 = scmp.ne.s32.totalorder %s55, %s57
      %p61 = scmp.eq.s32.totalorder %s9, 0
      %p62 = por %p60, %p61
      %p63 = scmp.ne.s32.totalorder %s55, %s57
      %p64 = scmp.eq.s32.totalorder %s14, 1
      %p65 = por %p63, %p64
      %p66 = scmp.ne.s32.totalorder %s57, %s58
      %p67 = scmp.eq.s32.totalorder %s14, 0
      %p68 = por %p66, %p67
      %p69 = scmp.ne.s32.totalorder %s57, %s58
      %p70 = scmp.eq.s32.totalorder %s15, 1
      %p71 = por %p69, %p70
      %p73 = scmp.ne.s32.totalorder %s58, %s72
      %p74 = scmp.eq.s32.totalorder %s15, 0
      %p75 = por %p73, %p74
      %s76 = ssub.s32 %s16, %s28
      %p77 = scmp.eq.s32.totalorder %s76, 0
      %s79 = sadd.s32 %s78, 1
      %s80 = scalar_select %p77, %s78, %s79
      %p83 = pneg %p77
      %p84 = scmp.eq.s32.totalorder %s9, 1
      %p85 = por %p83, %p84
      %p86 = scmp.ne.s32.totalorder %s78, %s81
      %p87 = scmp.eq.s32.totalorder %s9, 0
      %p88 = por %p86, %p87
      %p89 = scmp.ne.s32.totalorder %s78, %s81
      %p90 = scmp.eq.s32.totalorder %s14, 1
      %p91 = por %p89, %p90
      %p92 = scmp.ne.s32.totalorder %s81, %s82
      %p93 = scmp.eq.s32.totalorder %s14, 0
      %p94 = por %p92, %p93
      %p95 = scmp.ne.s32.totalorder %s81, %s82
      %p96 = scmp.eq.s32.totalorder %s15, 1
      %p97 = por %p95, %p96
      %p99 = scmp.ne.s32.totalorder %s82, %s98
      %p100 = scmp.eq.s32.totalorder %s15, 0
      %p101 = por %p99, %p100
      %s102 = smul.u32 %s16, 2
      %s103 = sadd.s32 %s102, %s17
      %s104 = smul.u32 %s28, 2
      %s105 = sadd.s32 %s104, %s24
      %s106 = ssub.s32 %s103, %s105
      %p107 = scmp.eq.s32.totalorder %s106, 0
      %s109 = sadd.s32 %s108, 1
      %s110 = scalar_select %p107, %s108, %s109
      %p113 = pneg %p107
      %p114 = scmp.eq.s32.totalorder %s9, 1
      %p115 = por %p113, %p114
      %p116 = scmp.ne.s32.totalorder %s108, %s111
      %p117 = scmp.eq.s32.totalorder %s9, 0
      %p118 = por %p116, %p117
      %p119 = scmp.ne.s32.totalorder %s108, %s111
      %p120 = scmp.eq.s32.totalorder %s14, 1
      %p121 = por %p119, %p120
      %p122 = scmp.ne.s32.totalorder %s111, %s112
      %p123 = scmp.eq.s32.totalorder %s14, 0
      %p124 = por %p122, %p123
      %p125 = scmp.ne.s32.totalorder %s111, %s112
      %p126 = scmp.eq.s32.totalorder %s15, 1
      %p127 = por %p125, %p126
      %p129 = scmp.ne.s32.totalorder %s112, %s128
      %p130 = scmp.eq.s32.totalorder %s15, 0
      %p131 = por %p129, %p130
      %p132 = scmp.le.s32.totalorder 1, %s9
      %p133 = scmp.lt.s32.totalorder %s9, 3
      %p134 = pnand %p132, %p133
      %p135 = pneg %p134
      // Predicated region
      $region9: #{ifft2c.1} parent=5 // pred_check
        _
      $region10: #{ifft2c.1} parent=5 // pred_check_branch
        %137 = sbr.rel (%p134) target = $region12
      $region11: #{ifft2c.1} parent=5 // pred_region
        %s138 = ssub.s32 %s9, 1
        // Predicated region
        $region13: #{ifft2c.1} parent=11 // pred_check
          %p139 = pneg %p68
        $region14: #{ifft2c.1} parent=11 // pred_check_branch
          %141 = sbr.rel (%p139) target = $region16
        $region15: #{ifft2c.1} parent=11 // pred_region
          _
        $region16: #{ifft2c.1} parent=11 // pred_fallthru
          _
        // Predicated region
        $region17: #{ifft2c.1} parent=11 // pred_check
          %p142 = pneg %p94
        $region18: #{ifft2c.1} parent=11 // pred_check_branch
          %144 = sbr.rel (%p142) target = $region20
        $region19: #{ifft2c.1} parent=11 // pred_region
          %s145 = smul.u32 2, %s18
          %p146 = scmp.lt.s32.totalorder %s145, 1
          %s147 = scalar_select %p146, %s145, 1
          %s148 = smul.addr %s147, 8
          %s149 = scalar_lea.vmem %s2, %s148
          %s150 = smul.u32 2, %s18
        $region20: #{ifft2c.1} parent=11 // pred_fallthru
          _
      $region12: #{ifft2c.1} parent=5 // pred_fallthru
        _
      %p151 = scmp.lt.s32.totalorder %s9, 2
      // Predicated region
      $region21: #{ifft2c.1} parent=5 // pred_check
        %p152 = pneg %p151
      $region22: #{ifft2c.1} parent=5 // pred_check_branch
        %154 = sbr.rel (%p152) target = $region24
      $region23: #{ifft2c.1} parent=5 // pred_region
        // Predicated region
        $region25: #{ifft2c.1} parent=23 // pred_check
          %p155 = pneg %p41
        $region26: #{ifft2c.1} parent=23 // pred_check_branch
          %157 = sbr.rel (%p155) target = $region28
        $region27: #{ifft2c.1} parent=23 // pred_region
          %s158 = sand.u32 %s31, 1
          %s159 = sand.u32 %s31, 1
          %s160 = smul.addr %s159, 16
          %s161 = scalar_lea.vmem [#allocation2], %s160
          %s162 = smul.addr %s17, 8
          %s163 = scalar_lea.vmem %s0, %s162
          // Predicated region
          $region29: #{ifft2c.1} parent=27 // pred_check
            _
          $region30: #{ifft2c.1} parent=27 // pred_check_branch
            %165 = sbr.rel (0) target = $region32
          $region31: #{ifft2c.1} parent=27 // pred_region
            // Predicated region
            $region33: #{ifft2c.1} parent=31 // pred_check
              _
            $region34: #{ifft2c.1} parent=31 // pred_check_branch
              %167 = sbr.rel (0) target = $region36
            $region35: #{ifft2c.1} parent=31 // pred_region
              // Predicated region
              $region48: #{ifft2c.1} parent=35 // pred_check
                _
              $region49: #{ifft2c.1} parent=35 // pred_check_branch
                %185 = sbr.rel (0) target = $region51
              $region50: #{ifft2c.1} parent=35 // pred_region
                loop: start=0, step=1, limit=1
                $region52: #{ifft2c.1} parent=50 // loop_pre_header
                  _
                $region53: #{ifft2c.1} parent=50 // loop_header
                  %s187 = sphi 0, %s191
                  %p188 = scmp.ge.s32.totalorder %s187, 1
                  %s192 = sphi %s163, %s163
                  %s193 = sphi %s161, %s161
                $region54: #{ifft2c.1} parent=50 // loop_header_branch
                  %190 = sbr.rel (%p188) target = $region58
                $region55: #{ifft2c.1} parent=50 // loop_body
                  %v194 = vld [vmem:[%s192] sm:$0xff]
                  %195 = vst [vmem:[%s193] sm:$0xff] %v194
                  %v196 = vld [vmem:[%s192 + $0x10] sm:$0xff]
                  %197 = vst [vmem:[%s193 + $0x8] sm:$0xff] %v196
                $region56: #{ifft2c.1} parent=50 // loop_footer
                  %s191 = sadd.s32 1, %s187
                $region57: #{ifft2c.1} parent=50 // loop_footer_branch
                  %186 = sbr.rel target = $region53
                $region58: #{ifft2c.1} parent=50 // loop_exit
                  _
              $region51: #{ifft2c.1} parent=35 // pred_fallthru
                _
              // Predicated region
              $region59: #{ifft2c.1} parent=35 // pred_check
                _
              $region60: #{ifft2c.1} parent=35 // pred_check_branch
                %199 = sbr.rel target = $region62
              $region61: #{ifft2c.1} parent=35 // pred_region
                _
              $region62: #{ifft2c.1} parent=35 // pred_fallthru
                _
            $region36: #{ifft2c.1} parent=31 // pred_fallthru
              _
            // Predicated region
            $region37: #{ifft2c.1} parent=31 // pred_check
              _
            $region38: #{ifft2c.1} parent=31 // pred_check_branch
              %169 = sbr.rel target = $region40
            $region39: #{ifft2c.1} parent=31 // pred_region
              %s171 = ssub.s32 256, 1
              loop: start=0, step=1, limit=1
              $region41: #{ifft2c.1} parent=39 // loop_pre_header
                _
              $region42: #{ifft2c.1} parent=39 // loop_header
                %s173 = sphi 0, %s177
                %p174 = scmp.ge.s32.totalorder %s173, 1
                %s178 = sphi %s163, %s163
                %s179 = sphi %s161, %s161
              $region43: #{ifft2c.1} parent=39 // loop_header_branch
                %176 = sbr.rel (%p174) target = $region47
              $region44: #{ifft2c.1} parent=39 // loop_body
                %v180 = vld [vmem:[%s178] sm:%s171]
                %181 = vst [vmem:[%s179] sm:%s171] %v180
                %v182 = vld [vmem:[%s178 + $0x10] sm:%s171]
                %183 = vst [vmem:[%s179 + $0x8] sm:%s171] %v182
              $region45: #{ifft2c.1} parent=39 // loop_footer
                %s177 = sadd.s32 1, %s173
              $region46: #{ifft2c.1} parent=39 // loop_footer_branch
                %172 = sbr.rel target = $region42
              $region47: #{ifft2c.1} parent=39 // loop_exit
                _
            $region40: #{ifft2c.1} parent=31 // pred_fallthru
              _
          $region32: #{ifft2c.1} parent=27 // pred_fallthru
            _
          %200 = vnop
        $region28: #{ifft2c.1} parent=23 // pred_fallthru
          _
      $region24: #{ifft2c.1} parent=5 // pred_fallthru
        _
      %p201 = scmp.le.s32.totalorder 1, %s9
      %p202 = scmp.lt.s32.totalorder %s9, 3
      %p203 = pnand %p201, %p202
      %p204 = pneg %p203
      // Predicated region
      $region63: #{ifft2c.1} parent=5 // pred_check
        _
      $region64: #{ifft2c.1} parent=5 // pred_check_branch
        %206 = sbr.rel (%p203) target = $region66
      $region65: #{ifft2c.1} parent=5 // pred_region
        %s207 = ssub.s32 %s9, 1
        %s208 = sand.u32 %s34, 1
        %s209 = sand.u32 %s34, 1
        %s210 = smul.addr %s209, 16
        %s211 = scalar_lea.vmem [#allocation2], %s210
        // Predicated region
        $region67: #{ifft2c.1} parent=65 // pred_check
          %p212 = pneg %p47
        $region68: #{ifft2c.1} parent=65 // pred_check_branch
          %214 = sbr.rel (%p212) target = $region70
        $region69: #{ifft2c.1} parent=65 // pred_region
          _
        $region70: #{ifft2c.1} parent=65 // pred_fallthru
          _
        %s215 = sand.u32 %s34, 1
        %s216 = sand.u32 %s34, 1
        %s217 = smul.addr %s216, 16
        %s218 = scalar_lea.vmem [#allocation2], %s217
        %p219 = pneg %p47
        %p220 = pneg %p44
        %p221 = pneg %p68
        %p222 = pneg %p65
        %s223 = smul.u32 2, %s18
        %p224 = scmp.lt.s32.totalorder %s223, 1
        %s225 = scalar_select %p224, %s223, 1
        %s226 = smul.addr %s225, 8
        %s227 = scalar_lea.vmem %s2, %s226
        %p228 = pneg %p94
        %p229 = pneg %p91
        %p230 = pneg %p124
        %p231 = pneg %p121
        %s232 = sand.u32 %s111, 1
        %s233 = sand.u32 %s111, 1
        %s234 = smul.addr %s233, 16
        %s235 = scalar_lea.vmem [#allocation3], %s234
        %s236 = smul.u32 2, %s18
        %p237 = scmp.lt.s32.totalorder %s236, 1
        %s238 = scalar_select %p237, %s236, 1
        %s239 = smul.addr %s238, 8
        %s240 = scalar_lea.vmem %s2, %s239
        %s241 = smul.u32 2, %s18
        %s242 = smul.u32 %s18, 2
        %s243 = sadd.s32 %s242, %s19
        %v244 = vld [vmem:[%s211] sm:$0xff]
        %s245 = scalar_lea.vmem %s211, 8 [#allocation2]
        %v246 = vld [vmem:[%s245] sm:$0xff]
        %v247 = vld [vmem:[%s1] sm:$0xff]
        %v248 = vld [vmem:[%s1 + $0x8] sm:$0xff]
        %v249 = vld [vmem:[%s1 + $0x10] sm:$0xff]
        %v250 = vld [vmem:[%s1 + $0x18] sm:$0xff]
        %v251 = vld [vmem:[%s1 + $0x20] sm:$0xff]
        %v252 = vld [vmem:[%s1 + $0x28] sm:$0xff]
        %v253 = vld [vmem:[%s1 + $0x30] sm:$0xff]
        %v254 = vld [vmem:[%s1 + $0x38] sm:$0xff]
        %v255 = vld [vmem:[%s1 + $0x40] sm:$0xff]
        %v256 = vld [vmem:[%s1 + $0x48] sm:$0xff]
        %v257 = vld [vmem:[%s1 + $0x50] sm:$0xff]
        %v258 = vld [vmem:[%s1 + $0x58] sm:$0xff]
        %v259 = vld [vmem:[%s1 + $0x60] sm:$0xff]
        %v260 = vld [vmem:[%s1 + $0x68] sm:$0xff]
        %v261 = vld [vmem:[%s1 + $0x70] sm:$0xff]
        %v262 = vld [vmem:[%s1 + $0x78] sm:$0xff]
        %s263 = scalar_lea.vmem %s1, 128
        %v264 = vld [vmem:[%s263] sm:$0xff]
        %v265 = vld [vmem:[%s263 + $0x8] sm:$0xff]
        %v266 = vld [vmem:[%s263 + $0x10] sm:$0xff]
        %v267 = vld [vmem:[%s263 + $0x18] sm:$0xff]
        %v268 = vld [vmem:[%s263 + $0x20] sm:$0xff]
        %v269 = vld [vmem:[%s263 + $0x28] sm:$0xff]
        %v270 = vld [vmem:[%s263 + $0x30] sm:$0xff]
        %v271 = vld [vmem:[%s263 + $0x38] sm:$0xff]
        %v272 = vld [vmem:[%s263 + $0x40] sm:$0xff]
        %v273 = vld [vmem:[%s263 + $0x48] sm:$0xff]
        %v274 = vld [vmem:[%s263 + $0x50] sm:$0xff]
        %v275 = vld [vmem:[%s263 + $0x58] sm:$0xff]
        %v276 = vld [vmem:[%s263 + $0x60] sm:$0xff]
        %v277 = vld [vmem:[%s263 + $0x68] sm:$0xff]
        %v278 = vld [vmem:[%s263 + $0x70] sm:$0xff]
        %v279 = vld [vmem:[%s263 + $0x78] sm:$0xff]
        %v280 = vld [vmem:[%s240] sm:$0xff]
        %v281 = vld [vmem:[%s240 + $0x8] sm:$0xff]
        %s282 = scalar_lea.vmem %s240, 16
        %v283 = vld [vmem:[%s282] sm:$0xff]
        %v284 = vld [vmem:[%s282 + $0x8] sm:$0xff]
        %vm285 = vcmask 130048
        %v287 = vsel %vm285, %v244, 0
        %289 = vmatprep.subr.mxu0 0.0
        %290 = vmatpush1.msra.mxu0 0.0
        %291 = vmatprep.subr.mxu0 0.0
        %292 = vmatpush1.msra.mxu0 0.0
        %293 = vmatprep.subr.mxu0 0.0
        %294 = vmatpush1.msra.mxu0 0.0
        %295 = vmatprep.subr.mxu0 0.0
        %296 = vmatpush1.msra.mxu0 0.0
        %297 = vmatprep.subr.mxu0 0.0
        %298 = vmatpush1.msra.mxu0 0.0
        %299 = vmatprep.subr.mxu0 0.0
        %300 = vmatpush1.msra.mxu0 0.0
        %301 = vmatprep.subr.mxu0 0.0
        %302 = vmatpush1.msra.mxu0 0.0
        %303 = vmatprep.subr.mxu0 0.0
        %304 = vmatpush1.msra.mxu0 0.0
        %305 = vmatprep.subr.mxu0 0.0
        %306 = vmatpush1.msra.mxu0 0.0
        %307 = vmatprep.subr.mxu0 0.0
        %308 = vmatpush1.msra.mxu0 0.0
        %309 = vmatprep.subr.mxu0 0.0
        %310 = vmatpush1.msra.mxu0 0.0
        %311 = vmatprep.subr.mxu0 0.0
        %312 = vmatpush1.msra.mxu0 0.0
        %313 = vmatprep.subr.mxu0 0.0
        %314 = vmatpush1.msra.mxu0 0.0
        %315 = vmatprep.subr.mxu0 0.0
        %316 = vmatpush1.msra.mxu0 0.0
        %317 = vmatprep.subr.mxu0 0.0
        %318 = vmatpush1.msra.mxu0 %v281
        %319 = vmatprep.subr.mxu0 0.0
        %320 = vmatpush1.msra.mxu0 %v280
        %321 = vmatprep.subr.mxu0 0.0
        %322 = vmatpush2.msra.mxu0 0.0
        %323 = vmatprep.subr.mxu0 0.0
        %324 = vmatpush2.msra.mxu0 0.0
        %325 = vmatprep.subr.mxu0 0.0
        %326 = vmatpush2.msra.mxu0 0.0
        %327 = vmatprep.subr.mxu0 0.0
        %328 = vmatpush2.msra.mxu0 0.0
        %329 = vmatprep.subr.mxu0 0.0
        %330 = vmatpush2.msra.mxu0 0.0
        %331 = vmatprep.subr.mxu0 0.0
        %332 = vmatpush2.msra.mxu0 0.0
        %333 = vmatprep.subr.mxu0 0.0
        %334 = vmatpush2.msra.mxu0 0.0
        %335 = vmatprep.subr.mxu0 0.0
        %336 = vmatpush2.msra.mxu0 0.0
        %337 = vmatprep.subr.mxu0 0.0
        %338 = vmatpush2.msra.mxu0 0.0
        %339 = vmatprep.subr.mxu0 0.0
        %340 = vmatpush2.msra.mxu0 0.0
        %341 = vmatprep.subr.mxu0 0.0
        %342 = vmatpush2.msra.mxu0 0.0
        %343 = vmatprep.subr.mxu0 0.0
        %344 = vmatpush2.msra.mxu0 0.0
        %345 = vmatprep.subr.mxu0 0.0
        %346 = vmatpush2.msra.mxu0 0.0
        %347 = vmatprep.subr.mxu0 0.0
        %348 = vmatpush2.msra.mxu0 0.0
        %349 = vmatprep.subr.mxu0 0.0
        %350 = vmatpush2.msra.mxu0 0.0
        %351 = vmatprep.subr.mxu0 0.0
        %352 = vmatpush2.msra.mxu0 0.0
        %353 = vmatprep.mubr.f32.mxu0 0.0
        %354 = vmatmul.mubr.f32.gmra.mxu0 %v287
        %v355 = vpop.f32.mrf.mxu0
        %v356 = vadd.f32 0.0, %v355
        %v357 = vpop.f32.mrf.mxu0
        %358 = vdwg.mxu0
        %v360 = vsel %vm285, %v246, 0
        %362 = vmatprep.subr.mxu0 0.0
        %363 = vmatpush1.msra.mxu0 0.0
        %364 = vmatprep.subr.mxu0 0.0
        %365 = vmatpush1.msra.mxu0 0.0
        %366 = vmatprep.subr.mxu0 0.0
        %367 = vmatpush1.msra.mxu0 0.0
        %368 = vmatprep.subr.mxu0 0.0
        %369 = vmatpush1.msra.mxu0 0.0
        %370 = vmatprep.subr.mxu0 0.0
        %371 = vmatpush1.msra.mxu0 0.0
        %372 = vmatprep.subr.mxu0 0.0
        %373 = vmatpush1.msra.mxu0 0.0
        %374 = vmatprep.subr.mxu0 0.0
        %375 = vmatpush1.msra.mxu0 0.0
        %376 = vmatprep.subr.mxu0 0.0
        %377 = vmatpush1.msra.mxu0 0.0
        %378 = vmatprep.subr.mxu0 0.0
        %379 = vmatpush1.msra.mxu0 0.0
        %380 = vmatprep.subr.mxu0 0.0
        %381 = vmatpush1.msra.mxu0 0.0
        %382 = vmatprep.subr.mxu0 0.0
        %383 = vmatpush1.msra.mxu0 0.0
        %384 = vmatprep.subr.mxu0 0.0
        %385 = vmatpush1.msra.mxu0 0.0
        %386 = vmatprep.subr.mxu0 0.0
        %387 = vmatpush1.msra.mxu0 0.0
        %388 = vmatprep.subr.mxu0 0.0
        %389 = vmatpush1.msra.mxu0 0.0
        %390 = vmatprep.subr.mxu0 0.0
        %391 = vmatpush1.msra.mxu0 %v284
        %392 = vmatprep.subr.mxu0 0.0
        %393 = vmatpush1.msra.mxu0 %v283
        %394 = vmatprep.subr.mxu0 0.0
        %395 = vmatpush2.msra.mxu0 0.0
        %396 = vmatprep.subr.mxu0 0.0
        %397 = vmatpush2.msra.mxu0 0.0
        %398 = vmatprep.subr.mxu0 0.0
        %399 = vmatpush2.msra.mxu0 0.0
        %400 = vmatprep.subr.mxu0 0.0
        %401 = vmatpush2.msra.mxu0 0.0
        %402 = vmatprep.subr.mxu0 0.0
        %403 = vmatpush2.msra.mxu0 0.0
        %404 = vmatprep.subr.mxu0 0.0
        %405 = vmatpush2.msra.mxu0 0.0
        %406 = vmatprep.subr.mxu0 0.0
        %407 = vmatpush2.msra.mxu0 0.0
        %408 = vmatprep.subr.mxu0 0.0
        %409 = vmatpush2.msra.mxu0 0.0
        %410 = vmatprep.subr.mxu0 0.0
        %411 = vmatpush2.msra.mxu0 0.0
        %412 = vmatprep.subr.mxu0 0.0
        %413 = vmatpush2.msra.mxu0 0.0
        %414 = vmatprep.subr.mxu0 0.0
        %415 = vmatpush2.msra.mxu0 0.0
        %416 = vmatprep.subr.mxu0 0.0
        %417 = vmatpush2.msra.mxu0 0.0
        %418 = vmatprep.subr.mxu0 0.0
        %419 = vmatpush2.msra.mxu0 0.0
        %420 = vmatprep.subr.mxu0 0.0
        %421 = vmatpush2.msra.mxu0 0.0
        %422 = vmatprep.subr.mxu0 0.0
        %423 = vmatpush2.msra.mxu0 0.0
        %424 = vmatprep.subr.mxu0 0.0
        %425 = vmatpush2.msra.mxu0 0.0
        %426 = vmatprep.mubr.f32.mxu0 0.0
        %427 = vmatmul.mubr.f32.gmra.mxu0 %v360
        %v428 = vpop.f32.mrf.mxu0
        %v429 = vadd.f32 0.0, %v428
        %v430 = vpop.f32.mrf.mxu0
        %431 = vdwg.mxu0
        %v432 = vadd.f32 %v244, %v246
        %v433 = vadd.f32 %v280, %v283
        %v434 = vadd.f32 %v281, %v284
        %v436 = vsel %vm285, %v432, 0
        %438 = vmatprep.subr.mxu0 0.0
        %439 = vmatpush1.msra.mxu0 0.0
        %440 = vmatprep.subr.mxu0 0.0
        %441 = vmatpush1.msra.mxu0 0.0
        %442 = vmatprep.subr.mxu0 0.0
        %443 = vmatpush1.msra.mxu0 0.0
        %444 = vmatprep.subr.mxu0 0.0
        %445 = vmatpush1.msra.mxu0 0.0
        %446 = vmatprep.subr.mxu0 0.0
        %447 = vmatpush1.msra.mxu0 0.0
        %448 = vmatprep.subr.mxu0 0.0
        %449 = vmatpush1.msra.mxu0 0.0
        %450 = vmatprep.subr.mxu0 0.0
        %451 = vmatpush1.msra.mxu0 0.0
        %452 = vmatprep.subr.mxu0 0.0
        %453 = vmatpush1.msra.mxu0 0.0
        %454 = vmatprep.subr.mxu0 0.0
        %455 = vmatpush1.msra.mxu0 0.0
        %456 = vmatprep.subr.mxu0 0.0
        %457 = vmatpush1.msra.mxu0 0.0
        %458 = vmatprep.subr.mxu0 0.0
        %459 = vmatpush1.msra.mxu0 0.0
        %460 = vmatprep.subr.mxu0 0.0
        %461 = vmatpush1.msra.mxu0 0.0
        %462 = vmatprep.subr.mxu0 0.0
        %463 = vmatpush1.msra.mxu0 0.0
        %464 = vmatprep.subr.mxu0 0.0
        %465 = vmatpush1.msra.mxu0 0.0
        %466 = vmatprep.subr.mxu0 0.0
        %467 = vmatpush1.msra.mxu0 %v434
        %468 = vmatprep.subr.mxu0 0.0
        %469 = vmatpush1.msra.mxu0 %v433
        %470 = vmatprep.subr.mxu0 0.0
        %471 = vmatpush2.msra.mxu0 0.0
        %472 = vmatprep.subr.mxu0 0.0
        %473 = vmatpush2.msra.mxu0 0.0
        %474 = vmatprep.subr.mxu0 0.0
        %475 = vmatpush2.msra.mxu0 0.0
        %476 = vmatprep.subr.mxu0 0.0
        %477 = vmatpush2.msra.mxu0 0.0
        %478 = vmatprep.subr.mxu0 0.0
        %479 = vmatpush2.msra.mxu0 0.0
        %480 = vmatprep.subr.mxu0 0.0
        %481 = vmatpush2.msra.mxu0 0.0
        %482 = vmatprep.subr.mxu0 0.0
        %483 = vmatpush2.msra.mxu0 0.0
        %484 = vmatprep.subr.mxu0 0.0
        %485 = vmatpush2.msra.mxu0 0.0
        %486 = vmatprep.subr.mxu0 0.0
        %487 = vmatpush2.msra.mxu0 0.0
        %488 = vmatprep.subr.mxu0 0.0
        %489 = vmatpush2.msra.mxu0 0.0
        %490 = vmatprep.subr.mxu0 0.0
        %491 = vmatpush2.msra.mxu0 0.0
        %492 = vmatprep.subr.mxu0 0.0
        %493 = vmatpush2.msra.mxu0 0.0
        %494 = vmatprep.subr.mxu0 0.0
        %495 = vmatpush2.msra.mxu0 0.0
        %496 = vmatprep.subr.mxu0 0.0
        %497 = vmatpush2.msra.mxu0 0.0
        %498 = vmatprep.subr.mxu0 0.0
        %499 = vmatpush2.msra.mxu0 0.0
        %500 = vmatprep.subr.mxu0 0.0
        %501 = vmatpush2.msra.mxu0 0.0
        %502 = vmatprep.mubr.f32.mxu0 0.0
        %503 = vmatmul.mubr.f32.gmra.mxu0 %v436
        %v504 = vpop.f32.mrf.mxu0
        %v505 = vadd.f32 0.0, %v504
        %v506 = vpop.f32.mrf.mxu0
        %507 = vdwg.mxu0
        %v508 = vsub.f32 %v356, %v429
        %v509 = vsub.f32 %v505, %v356
        %v510 = vsub.f32 %v509, %v429
        %511 = vmatprep.subr.mxu0 0.0
        %512 = vmatpush1.msra.mxu0 %v262
        %513 = vmatprep.subr.mxu0 0.0
        %514 = vmatpush1.msra.mxu0 %v261
        %515 = vmatprep.subr.mxu0 0.0
        %516 = vmatpush1.msra.mxu0 %v260
        %517 = vmatprep.subr.mxu0 0.0
        %518 = vmatpush1.msra.mxu0 %v259
        %519 = vmatprep.subr.mxu0 0.0
        %520 = vmatpush1.msra.mxu0 %v258
        %521 = vmatprep.subr.mxu0 0.0
        %522 = vmatpush1.msra.mxu0 %v257
        %523 = vmatprep.subr.mxu0 0.0
        %524 = vmatpush1.msra.mxu0 %v256
        %525 = vmatprep.subr.mxu0 0.0
        %526 = vmatpush1.msra.mxu0 %v255
        %527 = vmatprep.subr.mxu0 0.0
        %528 = vmatpush1.msra.mxu0 %v254
        %529 = vmatprep.subr.mxu0 0.0
        %530 = vmatpush1.msra.mxu0 %v253
        %531 = vmatprep.subr.mxu0 0.0
        %532 = vmatpush1.msra.mxu0 %v252
        %533 = vmatprep.subr.mxu0 0.0
        %534 = vmatpush1.msra.mxu0 %v251
        %535 = vmatprep.subr.mxu0 0.0
        %536 = vmatpush1.msra.mxu0 %v250
        %537 = vmatprep.subr.mxu0 0.0
        %538 = vmatpush1.msra.mxu0 %v249
        %539 = vmatprep.subr.mxu0 0.0
        %540 = vmatpush1.msra.mxu0 %v248
        %541 = vmatprep.subr.mxu0 0.0
        %542 = vmatpush1.msra.mxu0 %v247
        %543 = vmatprep.subr.mxu0 0.0
        %544 = vmatpush2.msra.mxu0 0.0
        %545 = vmatprep.subr.mxu0 0.0
        %546 = vmatpush2.msra.mxu0 0.0
        %547 = vmatprep.subr.mxu0 0.0
        %548 = vmatpush2.msra.mxu0 0.0
        %549 = vmatprep.subr.mxu0 0.0
        %550 = vmatpush2.msra.mxu0 0.0
        %551 = vmatprep.subr.mxu0 0.0
        %552 = vmatpush2.msra.mxu0 0.0
        %553 = vmatprep.subr.mxu0 0.0
        %554 = vmatpush2.msra.mxu0 0.0
        %555 = vmatprep.subr.mxu0 0.0
        %556 = vmatpush2.msra.mxu0 0.0
        %557 = vmatprep.subr.mxu0 0.0
        %558 = vmatpush2.msra.mxu0 0.0
        %559 = vmatprep.subr.mxu0 0.0
        %560 = vmatpush2.msra.mxu0 0.0
        %561 = vmatprep.subr.mxu0 0.0
        %562 = vmatpush2.msra.mxu0 0.0
        %563 = vmatprep.subr.mxu0 0.0
        %564 = vmatpush2.msra.mxu0 0.0
        %565 = vmatprep.subr.mxu0 0.0
        %566 = vmatpush2.msra.mxu0 0.0
        %567 = vmatprep.subr.mxu0 0.0
        %568 = vmatpush2.msra.mxu0 0.0
        %569 = vmatprep.subr.mxu0 0.0
        %570 = vmatpush2.msra.mxu0 0.0
        %571 = vmatprep.subr.mxu0 0.0
        %572 = vmatpush2.msra.mxu0 0.0
        %573 = vmatprep.subr.mxu0 0.0
        %574 = vmatpush2.msra.mxu0 0.0
        %575 = vmatprep.mubr.f32.mxu0 0.0
        %576 = vmatmul.mubr.f32.gmra.mxu0 %v508
        %v577 = vpop.f32.mrf.mxu0
        %v578 = vadd.f32 0.0, %v577
        %v579 = vpop.f32.mrf.mxu0
        %580 = vdwg.mxu0
        %581 = vmatprep.subr.mxu0 0.0
        %582 = vmatpush1.msra.mxu0 %v279
        %583 = vmatprep.subr.mxu0 0.0
        %584 = vmatpush1.msra.mxu0 %v278
        %585 = vmatprep.subr.mxu0 0.0
        %586 = vmatpush1.msra.mxu0 %v277
        %587 = vmatprep.subr.mxu0 0.0
        %588 = vmatpush1.msra.mxu0 %v276
        %589 = vmatprep.subr.mxu0 0.0
        %590 = vmatpush1.msra.mxu0 %v275
        %591 = vmatprep.subr.mxu0 0.0
        %592 = vmatpush1.msra.mxu0 %v274
        %593 = vmatprep.subr.mxu0 0.0
        %594 = vmatpush1.msra.mxu0 %v273
        %595 = vmatprep.subr.mxu0 0.0
        %596 = vmatpush1.msra.mxu0 %v272
        %597 = vmatprep.subr.mxu0 0.0
        %598 = vmatpush1.msra.mxu0 %v271
        %599 = vmatprep.subr.mxu0 0.0
        %600 = vmatpush1.msra.mxu0 %v270
        %601 = vmatprep.subr.mxu0 0.0
        %602 = vmatpush1.msra.mxu0 %v269
        %603 = vmatprep.subr.mxu0 0.0
        %604 = vmatpush1.msra.mxu0 %v268
        %605 = vmatprep.subr.mxu0 0.0
        %606 = vmatpush1.msra.mxu0 %v267
        %607 = vmatprep.subr.mxu0 0.0
        %608 = vmatpush1.msra.mxu0 %v266
        %609 = vmatprep.subr.mxu0 0.0
        %610 = vmatpush1.msra.mxu0 %v265
        %611 = vmatprep.subr.mxu0 0.0
        %612 = vmatpush1.msra.mxu0 %v264
        %613 = vmatprep.subr.mxu0 0.0
        %614 = vmatpush2.msra.mxu0 0.0
        %615 = vmatprep.subr.mxu0 0.0
        %616 = vmatpush2.msra.mxu0 0.0
        %617 = vmatprep.subr.mxu0 0.0
        %618 = vmatpush2.msra.mxu0 0.0
        %619 = vmatprep.subr.mxu0 0.0
        %620 = vmatpush2.msra.mxu0 0.0
        %621 = vmatprep.subr.mxu0 0.0
        %622 = vmatpush2.msra.mxu0 0.0
        %623 = vmatprep.subr.mxu0 0.0
        %624 = vmatpush2.msra.mxu0 0.0
        %625 = vmatprep.subr.mxu0 0.0
        %626 = vmatpush2.msra.mxu0 0.0
        %627 = vmatprep.subr.mxu0 0.0
        %628 = vmatpush2.msra.mxu0 0.0
        %629 = vmatprep.subr.mxu0 0.0
        %630 = vmatpush2.msra.mxu0 0.0
        %631 = vmatprep.subr.mxu0 0.0
        %632 = vmatpush2.msra.mxu0 0.0
        %633 = vmatprep.subr.mxu0 0.0
        %634 = vmatpush2.msra.mxu0 0.0
        %635 = vmatprep.subr.mxu0 0.0
        %636 = vmatpush2.msra.mxu0 0.0
        %637 = vmatprep.subr.mxu0 0.0
        %638 = vmatpush2.msra.mxu0 0.0
        %639 = vmatprep.subr.mxu0 0.0
        %640 = vmatpush2.msra.mxu0 0.0
        %641 = vmatprep.subr.mxu0 0.0
        %642 = vmatpush2.msra.mxu0 0.0
        %643 = vmatprep.subr.mxu0 0.0
        %644 = vmatpush2.msra.mxu0 0.0
        %645 = vmatprep.mubr.f32.mxu0 0.0
        %646 = vmatmul.mubr.f32.gmra.mxu0 %v510
        %v647 = vpop.f32.mrf.mxu0
        %v648 = vadd.f32 0.0, %v647
        %v649 = vpop.f32.mrf.mxu0
        %650 = vdwg.mxu0
        %v651 = vadd.f32 %v508, %v510
        %v652 = vadd.f32 %v247, %v264
        %v653 = vadd.f32 %v248, %v265
        %v654 = vadd.f32 %v249, %v266
        %v655 = vadd.f32 %v250, %v267
        %v656 = vadd.f32 %v251, %v268
        %v657 = vadd.f32 %v252, %v269
        %v658 = vadd.f32 %v253, %v270
        %v659 = vadd.f32 %v254, %v271
        %v660 = vadd.f32 %v255, %v272
        %v661 = vadd.f32 %v256, %v273
        %v662 = vadd.f32 %v257, %v274
        %v663 = vadd.f32 %v258, %v275
        %v664 = vadd.f32 %v259, %v276
        %v665 = vadd.f32 %v260, %v277
        %v666 = vadd.f32 %v261, %v278
        %v667 = vadd.f32 %v262, %v279
        %668 = vmatprep.subr.mxu0 0.0
        %669 = vmatpush1.msra.mxu0 %v667
        %670 = vmatprep.subr.mxu0 0.0
        %671 = vmatpush1.msra.mxu0 %v666
        %672 = vmatprep.subr.mxu0 0.0
        %673 = vmatpush1.msra.mxu0 %v665
        %674 = vmatprep.subr.mxu0 0.0
        %675 = vmatpush1.msra.mxu0 %v664
        %676 = vmatprep.subr.mxu0 0.0
        %677 = vmatpush1.msra.mxu0 %v663
        %678 = vmatprep.subr.mxu0 0.0
        %679 = vmatpush1.msra.mxu0 %v662
        %680 = vmatprep.subr.mxu0 0.0
        %681 = vmatpush1.msra.mxu0 %v661
        %682 = vmatprep.subr.mxu0 0.0
        %683 = vmatpush1.msra.mxu0 %v660
        %684 = vmatprep.subr.mxu0 0.0
        %685 = vmatpush1.msra.mxu0 %v659
        %686 = vmatprep.subr.mxu0 0.0
        %687 = vmatpush1.msra.mxu0 %v658
        %688 = vmatprep.subr.mxu0 0.0
        %689 = vmatpush1.msra.mxu0 %v657
        %690 = vmatprep.subr.mxu0 0.0
        %691 = vmatpush1.msra.mxu0 %v656
        %692 = vmatprep.subr.mxu0 0.0
        %693 = vmatpush1.msra.mxu0 %v655
        %694 = vmatprep.subr.mxu0 0.0
        %695 = vmatpush1.msra.mxu0 %v654
        %696 = vmatprep.subr.mxu0 0.0
        %697 = vmatpush1.msra.mxu0 %v653
        %698 = vmatprep.subr.mxu0 0.0
        %699 = vmatpush1.msra.mxu0 %v652
        %700 = vmatprep.subr.mxu0 0.0
        %701 = vmatpush2.msra.mxu0 0.0
        %702 = vmatprep.subr.mxu0 0.0
        %703 = vmatpush2.msra.mxu0 0.0
        %704 = vmatprep.subr.mxu0 0.0
        %705 = vmatpush2.msra.mxu0 0.0
        %706 = vmatprep.subr.mxu0 0.0
        %707 = vmatpush2.msra.mxu0 0.0
        %708 = vmatprep.subr.mxu0 0.0
        %709 = vmatpush2.msra.mxu0 0.0
        %710 = vmatprep.subr.mxu0 0.0
        %711 = vmatpush2.msra.mxu0 0.0
        %712 = vmatprep.subr.mxu0 0.0
        %713 = vmatpush2.msra.mxu0 0.0
        %714 = vmatprep.subr.mxu0 0.0
        %715 = vmatpush2.msra.mxu0 0.0
        %716 = vmatprep.subr.mxu0 0.0
        %717 = vmatpush2.msra.mxu0 0.0
        %718 = vmatprep.subr.mxu0 0.0
        %719 = vmatpush2.msra.mxu0 0.0
        %720 = vmatprep.subr.mxu0 0.0
        %721 = vmatpush2.msra.mxu0 0.0
        %722 = vmatprep.subr.mxu0 0.0
        %723 = vmatpush2.msra.mxu0 0.0
        %724 = vmatprep.subr.mxu0 0.0
        %725 = vmatpush2.msra.mxu0 0.0
        %726 = vmatprep.subr.mxu0 0.0
        %727 = vmatpush2.msra.mxu0 0.0
        %728 = vmatprep.subr.mxu0 0.0
        %729 = vmatpush2.msra.mxu0 0.0
        %730 = vmatprep.subr.mxu0 0.0
        %731 = vmatpush2.msra.mxu0 0.0
        %732 = vmatprep.mubr.f32.mxu0 0.0
        %733 = vmatmul.mubr.f32.gmra.mxu0 %v651
        %v734 = vpop.f32.mrf.mxu0
        %v735 = vadd.f32 0.0, %v734
        %v736 = vpop.f32.mrf.mxu0
        %737 = vdwg.mxu0
        %v738 = vsub.f32 %v578, %v648
        %739 = vst [vmem:[%s235] sm:$0xff] %v738
        %v740 = vsub.f32 %v735, %v578
        %v741 = vsub.f32 %v740, %v648
        %s742 = scalar_lea.vmem %s235, 8 [#allocation3]
        %743 = vst [vmem:[%s742] sm:$0xff] %v741
        %s744 = sand.u32 %s111, 1
        %s745 = sand.u32 %s111, 1
        %s746 = smul.addr %s745, 16
        %s747 = scalar_lea.vmem [#allocation3], %s746
        // Predicated region
        $region71: #{ifft2c.1} parent=65 // pred_check
          %p748 = pneg %p121
        $region72: #{ifft2c.1} parent=65 // pred_check_branch
          %750 = sbr.rel (%p748) target = $region74
        $region73: #{ifft2c.1} parent=65 // pred_region
          %s751 = smul.u32 %s18, 2
          %s752 = sadd.s32 %s751, %s19
          %s753 = smul.addr %s752, 8
          %s754 = scalar_lea.vmem %s3, %s753
          // Predicated region
          $region75: #{ifft2c.1} parent=73 // pred_check
            _
          $region76: #{ifft2c.1} parent=73 // pred_check_branch
            %756 = sbr.rel (0) target = $region78
          $region77: #{ifft2c.1} parent=73 // pred_region
            // Predicated region
            $region79: #{ifft2c.1} parent=77 // pred_check
              _
            $region80: #{ifft2c.1} parent=77 // pred_check_branch
              %758 = sbr.rel (0) target = $region82
            $region81: #{ifft2c.1} parent=77 // pred_region
              // Predicated region
              $region94: #{ifft2c.1} parent=81 // pred_check
                _
              $region95: #{ifft2c.1} parent=81 // pred_check_branch
                %776 = sbr.rel (0) target = $region97
              $region96: #{ifft2c.1} parent=81 // pred_region
                loop: start=0, step=1, limit=1
                $region98: #{ifft2c.1} parent=96 // loop_pre_header
                  _
                $region99: #{ifft2c.1} parent=96 // loop_header
                  %s778 = sphi 0, %s782
                  %p779 = scmp.ge.s32.totalorder %s778, 1
                  %s783 = sphi %s747, %s747
                  %s784 = sphi %s754, %s754
                $region100: #{ifft2c.1} parent=96 // loop_header_branch
                  %781 = sbr.rel (%p779) target = $region104
                $region101: #{ifft2c.1} parent=96 // loop_body
                  %v785 = vld [vmem:[%s783] sm:$0xff]
                  %786 = vst [vmem:[%s784] sm:$0xff] %v785
                  %v787 = vld [vmem:[%s783 + $0x8] sm:$0xff]
                  %788 = vst [vmem:[%s784 + $0x10] sm:$0xff] %v787
                $region102: #{ifft2c.1} parent=96 // loop_footer
                  %s782 = sadd.s32 1, %s778
                $region103: #{ifft2c.1} parent=96 // loop_footer_branch
                  %777 = sbr.rel target = $region99
                $region104: #{ifft2c.1} parent=96 // loop_exit
                  _
              $region97: #{ifft2c.1} parent=81 // pred_fallthru
                _
              // Predicated region
              $region105: #{ifft2c.1} parent=81 // pred_check
                _
              $region106: #{ifft2c.1} parent=81 // pred_check_branch
                %790 = sbr.rel target = $region108
              $region107: #{ifft2c.1} parent=81 // pred_region
                _
              $region108: #{ifft2c.1} parent=81 // pred_fallthru
                _
            $region82: #{ifft2c.1} parent=77 // pred_fallthru
              _
            // Predicated region
            $region83: #{ifft2c.1} parent=77 // pred_check
              _
            $region84: #{ifft2c.1} parent=77 // pred_check_branch
              %760 = sbr.rel target = $region86
            $region85: #{ifft2c.1} parent=77 // pred_region
              %s762 = ssub.s32 256, 1
              loop: start=0, step=1, limit=1
              $region87: #{ifft2c.1} parent=85 // loop_pre_header
                _
              $region88: #{ifft2c.1} parent=85 // loop_header
                %s764 = sphi 0, %s768
                %p765 = scmp.ge.s32.totalorder %s764, 1
                %s769 = sphi %s747, %s747
                %s770 = sphi %s754, %s754
              $region89: #{ifft2c.1} parent=85 // loop_header_branch
                %767 = sbr.rel (%p765) target = $region93
              $region90: #{ifft2c.1} parent=85 // loop_body
                %v771 = vld [vmem:[%s769] sm:%s762]
                %772 = vst [vmem:[%s770] sm:%s762] %v771
                %v773 = vld [vmem:[%s769 + $0x8] sm:%s762]
                %774 = vst [vmem:[%s770 + $0x10] sm:%s762] %v773
              $region91: #{ifft2c.1} parent=85 // loop_footer
                %s768 = sadd.s32 1, %s764
              $region92: #{ifft2c.1} parent=85 // loop_footer_branch
                %763 = sbr.rel target = $region88
              $region93: #{ifft2c.1} parent=85 // loop_exit
                _
            $region86: #{ifft2c.1} parent=77 // pred_fallthru
              _
          $region78: #{ifft2c.1} parent=73 // pred_fallthru
            _
          %791 = vnop
        $region74: #{ifft2c.1} parent=65 // pred_fallthru
          _
      $region66: #{ifft2c.1} parent=5 // pred_fallthru
        _
      %p792 = scmp.le.s32.totalorder 2, %s9
      // Predicated region
      $region109: #{ifft2c.1} parent=5 // pred_check
        %p793 = pneg %p792
      $region110: #{ifft2c.1} parent=5 // pred_check_branch
        %795 = sbr.rel (%p793) target = $region112
      $region111: #{ifft2c.1} parent=5 // pred_region
        %s796 = ssub.s32 %s9, 2
        // Predicated region
        $region113: #{ifft2c.1} parent=111 // pred_check
          %p797 = pneg %p127
        $region114: #{ifft2c.1} parent=111 // pred_check_branch
          %799 = sbr.rel (%p797) target = $region116
        $region115: #{ifft2c.1} parent=111 // pred_region
          %s800 = sand.u32 %s112, 1
          %s801 = sand.u32 %s112, 1
          %s802 = smul.addr %s801, 16
          %s803 = scalar_lea.vmem [#allocation3], %s802
        $region116: #{ifft2c.1} parent=111 // pred_fallthru
          _
      $region112: #{ifft2c.1} parent=5 // pred_fallthru
        _
    $region6: #{ifft2c.1} parent=1 // loop_footer
      %s13 = sadd.s32 1, %s9
    $region7: #{ifft2c.1} parent=1 // loop_footer_branch
      %8 = sbr.rel target = $region3
    $region8: #{ifft2c.1} parent=1 // loop_exit
      _

</llo_original>
